<compile_context>
chip_gen: v6e
topology: v6e:2x2x1
jax: 0.10.0
libtpu: 0.0.40
codegen_flags: <defaults>
</compile_context>

<pallas_src>
import math

import jax
import jax.numpy as jnp
from jax.experimental import pallas as pl
from jax.experimental.pallas import tpu as pltpu

BN_EPS_POINT = 1e-5   # PointBatchNorm (nn.BatchNorm1d default)
BN_EPS_PD = 1e-3      # PDBatchNorm (eps=1e-3 in the pdnorm variant)

_PARALLEL = pltpu.CompilerParams(dimension_semantics=("parallel",))
_TILE_LIN = 2048
_TILE_ATTN = 1024


def _round_up(x, m):
    return ((x + m - 1) // m) * m


def _row_tiling(n):
    """(linear tile, attention tile, padded N). Always >= 2 grid steps (v7x: 2 TCs)."""
    if n >= 2 * _TILE_LIN:
        return _TILE_LIN, _TILE_ATTN, _round_up(n, _TILE_LIN)
    t = _round_up(max((n + 1) // 2, 8), 8)
    return t, t, 2 * t


# --------------------------------------------------------------------------
# Pallas kernels
# --------------------------------------------------------------------------
def _linear_relu_kernel(x_ref, w_ref, t_ref, o_ref):
    # y = relu(x @ w + shift)   (BN folded into w / shift host-side)
    y = jnp.dot(x_ref[...], w_ref[...], preferred_element_type=jnp.float32) + t_ref[...]
    o_ref[...] = jnp.maximum(y, 0.0)


def _fc1_qkv_kernel(x_ref, w1_ref, t1_ref, wqkv_ref, tqkv_ref, lb_ref, q_ref, kv_ref):
    # fc1 -> PDNorm(BN) -> ReLU, then the concatenated q/k/v projection.
    y = jnp.dot(x_ref[...], w1_ref[...], preferred_element_type=jnp.float32) + t1_ref[...]
    y = jnp.maximum(y, 0.0)
    z = jnp.dot(y, wqkv_ref[...], preferred_element_type=jnp.float32) + tqkv_ref[...]
    # lower-bound vector: 0 for q/k columns (ReLU), -inf for v columns (identity)
    z = jnp.maximum(z, lb_ref[...])
    c = q_ref.shape[1]
    q_ref[...] = z[:, :c]
    kv_ref[...] = z[:, c:].astype(kv_ref.dtype)      # combined k|v, bf16, 2C lanes


def _attn_block_kernel(q_ref, kvg_ref, pos_ref, mask_ref, res_ref,
                       pw1_ref, pt1_ref, pw2_ref, pb2_ref,
                       ww1_ref, wt1_ref, ww2e_ref, wb2e_ref,
                       s2_ref, t2_ref, w3_ref, t3_ref, o_ref):
    tm, k = kvg_ref.shape[0], kvg_ref.shape[1]
    c = q_ref.shape[1]

    # pe-bias MLP: Linear(3->C) -> BN(folded) -> ReLU -> Linear(C->C); pos is pre-flattened.
    pos2 = pos_ref[...]                                               # (tm*k, 3)
    h = jnp.dot(pos2, pw1_ref[...], preferred_element_type=jnp.float32) + pt1_ref[...]
    h = jnp.maximum(h, 0.0)
    peb2 = jnp.dot(h, pw2_ref[...], preferred_element_type=jnp.float32) + pb2_ref[...]
    peb = peb2.reshape(tm, k, c)

    kv = kvg_ref[...].astype(jnp.float32)                             # (tm, k, 2C)
    kg = kv[:, :, :c]
    vg = kv[:, :, c:]
    relation = kg - q_ref[...][:, None, :] + peb
    val = vg + peb

    # weight encoding: Linear(C->G) -> BN(folded) -> ReLU -> Linear(G->G) pre-expanded to C
    hw = jnp.dot(relation.reshape(tm * k, c), ww1_ref[...],
                 preferred_element_type=jnp.float32) + wt1_ref[...]
    hw = jnp.maximum(hw, 0.0)
    logits = (jnp.dot(hw, ww2e_ref[...], preferred_element_type=jnp.float32)
              + wb2e_ref[...]).reshape(tm, k, c)

    # softmax over neighbours at full C lane width (group expansion commutes with softmax);
    # mask applied AFTER normalization, matching the PTv2 reference.
    mx = jnp.max(logits, axis=1, keepdims=True)
    e = jnp.exp(logits - mx)
    w = e * pl.reciprocal(jnp.sum(e, axis=1, keepdims=True), approx=True)
    w = w * mask_ref[...][:, :, None]

    agg = jnp.sum(val * w, axis=1)                                    # (tm, C)

    # epilogue: norm2(BN folded)+ReLU, fc3+norm3(folded), residual, ReLU
    f2 = jnp.maximum(agg * s2_ref[...] + t2_ref[...], 0.0)
    y = jnp.dot(f2, w3_ref[...], preferred_element_type=jnp.float32) + t3_ref[...]
    o_ref[...] = jnp.maximum(y + res_ref[...], 0.0)


# --------------------------------------------------------------------------
# pallas_call wrappers
# --------------------------------------------------------------------------
def linear_bn_relu(x, w, shift):
    """relu(x @ w + shift); pads/slices rows (used once, by GridPool)."""
    m, cin = x.shape
    cout = w.shape[1]
    tile, _, mp = _row_tiling(m)
    xp = jnp.pad(x, ((0, mp - m), (0, 0)))
    out = pl.pallas_call(
        _linear_relu_kernel,
        out_shape=jax.ShapeDtypeStruct((mp, cout), jnp.float32),
        grid=(mp // tile,),
        in_specs=[
            pl.BlockSpec((tile, cin), lambda i: (i, 0)),
            pl.BlockSpec((cin, cout), lambda i: (0, 0)),
            pl.BlockSpec((1, cout), lambda i: (0, 0)),
        ],
        out_specs=pl.BlockSpec((tile, cout), lambda i: (i, 0)),
        compiler_params=_PARALLEL,
    )(xp, w, shift.reshape(1, cout))
    return out[:m]


def fc1_qkv(x, fp, tile):
    np_, c = x.shape
    c3 = fp["wqkv"].shape[1]
    return pl.pallas_call(
        _fc1_qkv_kernel,
        out_shape=(jax.ShapeDtypeStruct((np_, c), jnp.float32),
                   jax.ShapeDtypeStruct((np_, 2 * c), jnp.bfloat16)),
        grid=(np_ // tile,),
        in_specs=[
            pl.BlockSpec((tile, c), lambda i: (i, 0)),
            pl.BlockSpec((c, c), lambda i: (0, 0)),
            pl.BlockSpec((1, c), lambda i: (0, 0)),
            pl.BlockSpec((c, c3), lambda i: (0, 0)),
            pl.BlockSpec((1, c3), lambda i: (0, 0)),
            pl.BlockSpec((1, c3), lambda i: (0, 0)),
        ],
        out_specs=(pl.BlockSpec((tile, c), lambda i: (i, 0)),
                   pl.BlockSpec((tile, 2 * c), lambda i: (i, 0))),
        compiler_params=_PARALLEL,
    )(x, fp["w1"], fp["t1"], fp["wqkv"], fp["tqkv"], fp["lb"])


def attn_block_fused(q, kvg, pos_flat, mask, residual, fp, tile):
    np_, c = q.shape
    k = kvg.shape[1]
    g = fp["ww1"].shape[1]
    return pl.pallas_call(
        _attn_block_kernel,
        out_shape=jax.ShapeDtypeStruct((np_, c), jnp.float32),
        grid=(np_ // tile,),
        in_specs=[
            pl.BlockSpec((tile, c), lambda i: (i, 0)),            # q
            pl.BlockSpec((tile, k, 2 * c), lambda i: (i, 0, 0)),  # gathered k|v (bf16)
            pl.BlockSpec((tile * k, 3), lambda i: (i, 0)),        # relative xyz, pre-flattened
            pl.BlockSpec((tile, k), lambda i: (i, 0)),            # neighbour mask
            pl.BlockSpec((tile, c), lambda i: (i, 0)),            # residual (identity)
            pl.BlockSpec((3, c), lambda i: (0, 0)),               # pe linear1 (folded BN)
            pl.BlockSpec((1, c), lambda i: (0, 0)),
            pl.BlockSpec((c, c), lambda i: (0, 0)),               # pe linear2
            pl.BlockSpec((1, c), lambda i: (0, 0)),
            pl.BlockSpec((c, g), lambda i: (0, 0)),               # weight-enc linear1 (folded BN)
            pl.BlockSpec((1, g), lambda i: (0, 0)),
            pl.BlockSpec((g, c), lambda i: (0, 0)),               # weight-enc linear2, pre-expanded
            pl.BlockSpec((1, c), lambda i: (0, 0)),
            pl.BlockSpec((1, c), lambda i: (0, 0)),               # norm2 scale
            pl.BlockSpec((1, c), lambda i: (0, 0)),               # norm2 shift
            pl.BlockSpec((c, c), lambda i: (0, 0)),               # fc3 (norm3 folded)
            pl.BlockSpec((1, c), lambda i: (0, 0)),               # norm3 shift
        ],
        out_specs=pl.BlockSpec((tile, c), lambda i: (i, 0)),
        compiler_params=pltpu.CompilerParams(
            dimension_semantics=("parallel",),
            vmem_limit_bytes=48 * 1024 * 1024),
    )(q, kvg, pos_flat, mask, residual,
      fp["pw1"], fp["pt1"], fp["pw2"], fp["pb2"],
      fp["ww1"], fp["wt1"], fp["ww2e"], fp["wb2e"],
      fp["s2"], fp["t2"], fp["w3"], fp["t3"])


# --------------------------------------------------------------------------
# Plain-JAX glue (KNN, gathers, grid pooling, parameter folding)
# --------------------------------------------------------------------------
def bn_fold(bn, eps):
    scale = bn["gamma"] / jnp.sqrt(bn["var"] + eps)
    shift = bn["beta"] - bn["mean"] * scale
    return scale, shift


def offset2batch(offset, n):
    return jnp.searchsorted(offset, jnp.arange(n), side="right").astype(jnp.int32)


def knn_query(k, coord, offset):
    # TODO(synk): pointops.knn_query (CUDA) replaced by brute-force per-batch KNN; O(N^2)
    #             distance matrix should be swapped for a grid-hash KNN at realistic N.
    n = coord.shape[0]
    batch = offset2batch(offset, n)
    d2 = jnp.sum((coord[:, None, :] - coord[None, :, :]) ** 2, axis=-1)
    d2 = jnp.where(batch[:, None] == batch[None, :], d2, jnp.inf)
    vals, idx = jax.lax.top_k(-d2, k)
    idx = jnp.where(jnp.isneginf(vals), -1, idx)     # -1 marks missing neighbours
    return idx.astype(jnp.int32)


def grid_pool_forward(p, coord, feat, offset, cond_idx, context, grid_size):
    n = coord.shape[0]
    b = offset.shape[0]
    batch = offset2batch(offset, n)

    # fc -> PDNorm(BN, folded) -> ReLU   (Pallas)
    s, t = bn_fold(p["norm"][cond_idx], BN_EPS_PD)
    feat = linear_bn_relu(feat, p["fc_w"] * s[None, :], t)

    # TODO(synk): voxel_grid + segment_csr pooling kept in plain (eager) JAX — data-dependent
    #             output size + segment reductions have no clean Pallas equivalent; the
    #             int()/unique calls force host sync and keep this outside jit.
    start = jax.ops.segment_min(coord, batch, num_segments=b)
    cell = jnp.floor((coord - start[batch]) / grid_size).astype(jnp.int32)
    span = int(jnp.max(cell)) + 1
    key = ((batch * span + cell[:, 0]) * span + cell[:, 1]) * span + cell[:, 2]
    _, inv = jnp.unique(key, return_inverse=True)
    inv = inv.ravel().astype(jnp.int32)
    m = int(jnp.max(inv)) + 1
    cnt = jax.ops.segment_sum(jnp.ones((n,), jnp.float32), inv, num_segments=m)
    coord = jax.ops.segment_sum(coord, inv, num_segments=m) / cnt[:, None]
    feat = jax.ops.segment_max(feat, inv, num_segments=m)
    new_batch = jax.ops.segment_min(batch, inv, num_segments=m)
    offset = jnp.cumsum(jnp.bincount(new_batch, length=b)).astype(jnp.int32)
    return (coord, feat, offset, cond_idx, context), inv


def fold_block_params(p, cond_idx, c, g):
    """Fold all BatchNorms / concat q|k|v / pre-expand group->channel weights, once per block."""
    a = p["attn"]
    s1, t1 = bn_fold(p["norm1"][cond_idx], BN_EPS_PD)
    sq, tq = bn_fold(a["q_bn"], BN_EPS_POINT)
    sk, tk = bn_fold(a["k_bn"], BN_EPS_POINT)
    wqkv = jnp.concatenate([a["q_w"] * sq[None, :], a["k_w"] * sk[None, :], a["v_w"]], axis=1)
    tqkv = jnp.concatenate([a["q_b"] * sq + tq, a["k_b"] * sk + tk, a["v_b"]], axis=0)
    lb = jnp.concatenate([jnp.zeros((2 * c,), jnp.float32),
                          jnp.full((c,), -jnp.inf, jnp.float32)], axis=0)
    sp, tp = bn_fold(a["p_bn"], BN_EPS_POINT)
    sw, tw = bn_fold(a["we_bn"], BN_EPS_POINT)
    s2, t2 = bn_fold(p["norm2"][cond_idx], BN_EPS_PD)
    s3, t3 = bn_fold(p["norm3"][cond_idx], BN_EPS_PD)
    rep = c // g
    return {
        "w1": p["fc1_w"] * s1[None, :], "t1": t1.reshape(1, c),
        "wqkv": wqkv, "tqkv": tqkv.reshape(1, 3 * c), "lb": lb.reshape(1, 3 * c),
        "pw1": a["p_w1"] * sp[None, :], "pt1": (a["p_b1"] * sp + tp).reshape(1, c),
        "pw2": a["p_w2"], "pb2": a["p_b2"].reshape(1, c),
        "ww1": a["we_w1"] * sw[None, :], "wt1": (a["we_b1"] * sw + tw).reshape(1, g),
        "ww2e": jnp.repeat(a["we_w2"], rep, axis=1),          # (G, C): ww2 @ e_mat
        "wb2e": jnp.repeat(a["we_b2"], rep).reshape(1, c),     # (1, C): wb2 @ e_mat
        "s2": s2.reshape(1, c), "t2": t2.reshape(1, c),
        "w3": p["fc3_w"] * s3[None, :], "t3": t3.reshape(1, c),
    }


def block_forward(fp, feat, pos_flat, idx, mask, tile_lin, tile_attn):
    identity = feat
    q, kv = fc1_qkv(feat, fp, tile_lin)
    # TODO(synk): the neighbour gather stays in XLA (one combined bf16 gather); a Pallas
    #             in-kernel row gather from a VMEM-resident table is not expressible with
    #             BlockSpec and general lax.gather does not lower in Mosaic.
    kvg = kv[idx]                                   # (Np, K, 2C) bf16
    return attn_block_fused(q, kvg, pos_flat, mask, identity, fp, tile_attn)


def block_sequence_forward(blocks, coord, feat, offset, cond_idx, neighbours, groups):
    n, c = feat.shape
    ref_idx = knn_query(neighbours, coord, offset)          # (N, K), -1 = invalid
    tile_lin, tile_attn, np_ = _row_tiling(n)

    # pad the point axis ONCE for the whole sequence; slice back only at the end.
    coord_p = jnp.pad(coord, ((0, np_ - n), (0, 0)))
    feat_p = jnp.pad(feat, ((0, np_ - n), (0, 0)))
    ref_p = jnp.pad(ref_idx, ((0, np_ - n), (0, 0)), constant_values=-1)
    mask = (ref_p >= 0).astype(jnp.float32)                 # (Np, K)
    idx = jnp.where(ref_p >= 0, ref_p, 0)                   # clamp for gathers
    pos_flat = (coord_p[idx] - coord_p[:, None, :]).reshape(np_ * neighbours, 3)

    # hoist all per-block weight folding out of the block loop (one prep per forward/cond)
    folded = [fold_block_params(bp, cond_idx, c, groups) for bp in blocks]
    for fp in folded:
        feat_p = block_forward(fp, feat_p, pos_flat, idx, mask, tile_lin, tile_attn)
    return feat_p[:n]


def encoder_forward(params, coord, feat, offset, cond_idx, context,
                    grid_size, neighbours, groups):
    (coord, feat, offset, cond_idx, context), cluster = grid_pool_forward(
        params["down"], coord, feat, offset, cond_idx, context, grid_size)
    feat = block_sequence_forward(params["blocks"], coord, feat, offset,
                                  cond_idx, neighbours, groups)
    # TODO(synk): PDNorm adaptive context modulation (adaptive=True) not implemented;
    #             `context` is carried through unused (default adaptive=False).
    return [coord, feat, offset, cond_idx, context], cluster


# --------------------------------------------------------------------------
# Deterministic parameter init (PyTorch-like shapes; synthetic values)
# --------------------------------------------------------------------------
def init_linear(key, cin, cout, bias=True):
    kw, kb = jax.random.split(key)
    lim = 1.0 / math.sqrt(cin)
    w = jax.random.uniform(kw, (cin, cout), jnp.float32, -lim, lim)
    b = (jax.random.uniform(kb, (cout,), jnp.float32, -lim, lim)
         if bias else jnp.zeros((cout,), jnp.float32))
    return w, b


def init_bn(key, c):
    k1, k2, k3, k4 = jax.random.split(key, 4)
    return {
        "gamma": jax.random.uniform(k1, (c,), jnp.float32, 0.8, 1.2),
        "beta": 0.05 * jax.random.normal(k2, (c,), jnp.float32),
        "mean": 0.1 * jax.random.normal(k3, (c,), jnp.float32),
        "var": jax.random.uniform(k4, (c,), jnp.float32, 0.8, 1.2),
    }


def init_pdnorm(key, c, ncond):
    return [init_bn(k, c) for k in jax.random.split(key, ncond)]


def init_attn(key, c, g):
    ks = jax.random.split(key, 11)
    q_w, q_b = init_linear(ks[0], c, c, True)
    k_w, k_b = init_linear(ks[1], c, c, True)
    v_w, v_b = init_linear(ks[2], c, c, True)
    p_w1, p_b1 = init_linear(ks[3], 3, c, True)
    p_w2, p_b2 = init_linear(ks[4], c, c, True)
    we_w1, we_b1 = init_linear(ks[5], c, g, True)
    we_w2, we_b2 = init_linear(ks[6], g, g, True)
    return {
        "q_w": q_w, "q_b": q_b, "q_bn": init_bn(ks[7], c),
        "k_w": k_w, "k_b": k_b, "k_bn": init_bn(ks[8], c),
        "v_w": v_w, "v_b": v_b,
        "p_w1": p_w1, "p_b1": p_b1, "p_bn": init_bn(ks[9], c),
        "p_w2": p_w2, "p_b2": p_b2,
        "we_w1": we_w1, "we_b1": we_b1, "we_bn": init_bn(ks[10], g),
        "we_w2": we_w2, "we_b2": we_b2,
    }


def init_block(key, c, g, ncond):
    ks = jax.random.split(key, 6)
    fc1_w, _ = init_linear(ks[0], c, c, False)
    fc3_w, _ = init_linear(ks[1], c, c, False)
    return {
        "fc1_w": fc1_w,
        "fc3_w": fc3_w,
        "norm1": init_pdnorm(ks[2], c, ncond),
        "norm2": init_pdnorm(ks[3], c, ncond),
        "norm3": init_pdnorm(ks[4], c, ncond),
        "attn": init_attn(ks[5], c, g),
    }


def init_encoder(key, depth, cin, c, g, ncond):
    kd, kn, kb = jax.random.split(key, 3)
    fc_w, _ = init_linear(kd, cin, c, bias=False)
    return {
        "down": {"fc_w": fc_w, "norm": init_pdnorm(kn, c, ncond)},
        "blocks": [init_block(k, c, g, ncond) for k in jax.random.split(kb, depth)],
    }


# --------------------------------------------------------------------------
if __name__ == "__main__":
    N1, N2 = 80, 64          # two point clouds in the batch
    N = N1 + N2
    CIN = 16                 # in_channels (GridPool input)
    C = 32                   # embed_channels
    G = 4                    # groups
    K = 8                    # neighbours
    DEPTH = 2
    NCOND = 3                # PDNorm conditions
    COND_IDX = 1             # condition selector (string -> index)
    GRID_SIZE = 0.3

    key = jax.random.PRNGKey(0)
    kc, kf, kx, kp = jax.random.split(key, 4)
    coord = jax.random.uniform(kc, (N, 3), jnp.float32)
    feat = jax.random.normal(kf, (N, CIN), jnp.float32)
    offset = jnp.array([N1, N], dtype=jnp.int32)
    context = jax.random.normal(kx, (1, 256), jnp.float32)   # unused (adaptive=False)

    params = init_encoder(kp, DEPTH, CIN, C, G, NCOND)

    points_out, cluster = encoder_forward(params, coord, feat, offset, COND_IDX,
                                          context, GRID_SIZE, neighbours=K, groups=G)
    coord_o, feat_o = points_out[0], points_out[1]
    jax.block_until_ready(feat_o)
    assert feat_o.shape[0] == coord_o.shape[0] and feat_o.shape[1] == C
    assert cluster.shape == (N,)
    assert bool(jnp.all(jnp.isfinite(feat_o)))
    print("KERNEL_OK")
</pallas_src>

<mosaic_0001>
module attributes {stable_mosaic.version = 11 : i64} {
  func.func @_linear_relu_kernel(%arg0: i32, %arg1: memref<72x16xf32, #tpu.memory_space<vmem>>, %arg2: memref<16x32xf32, #tpu.memory_space<vmem>>, %arg3: memref<1x32xf32, #tpu.memory_space<vmem>>, %arg4: memref<72x32xf32, #tpu.memory_space<vmem>>) attributes {dimension_semantics = [#tpu.dimension_semantics<parallel>], iteration_bounds = array<i64: 2>, scalar_prefetch = 0 : i64, scratch_operands = 0 : i64, tpu.core_type = #tpu.core_type<tc>, window_params = [{transform_indices = @transform_0, window_bounds = array<i64: 72, 16>}, {pipeline_mode = #tpu.pipeline_mode<synchronous>, transform_indices = @transform_1, window_bounds = array<i64: 16, 32>}, {pipeline_mode = #tpu.pipeline_mode<synchronous>, transform_indices = @transform_2, window_bounds = array<i64: 1, 32>}, {transform_indices = @transform_3, window_bounds = array<i64: 72, 32>}]} {
    %c0 = arith.constant 0 : index
    %c0_0 = arith.constant 0 : index
    %0 = vector.load %arg1[%c0, %c0_0] : memref<72x16xf32, #tpu.memory_space<vmem>>, vector<72x16xf32>
    %c0_1 = arith.constant 0 : index
    %c0_2 = arith.constant 0 : index
    %1 = vector.load %arg2[%c0_1, %c0_2] : memref<16x32xf32, #tpu.memory_space<vmem>>, vector<16x32xf32>
    %cst = arith.constant dense<0.000000e+00> : vector<72x32xf32>
    %2 = tpu.matmul %0, %1, %cst {dimension_numbers = #tpu.dot_dimension_numbers<[1], [0], [0], [1], [0, 0, 1, 1], [], []>} : vector<72x16xf32>, vector<16x32xf32>, vector<72x32xf32> -> vector<72x32xf32>
    %c0_3 = arith.constant 0 : index
    %c0_4 = arith.constant 0 : index
    %3 = vector.load %arg3[%c0_3, %c0_4] : memref<1x32xf32, #tpu.memory_space<vmem>>, vector<1x32xf32>
    %4 = vector.broadcast %3 : vector<1x32xf32> to vector<72x32xf32>
    %5 = arith.addf %2, %4 : vector<72x32xf32>
    %cst_5 = arith.constant 0.000000e+00 : f32
    %6 = vector.broadcast %cst_5 : f32 to vector<72x32xf32>
    %7 = arith.maximumf %5, %6 : vector<72x32xf32>
    %c0_6 = arith.constant 0 : index
    %c0_7 = arith.constant 0 : index
    %8 = vector.load %arg4[%c0_6, %c0_7] : memref<72x32xf32, #tpu.memory_space<vmem>>, vector<72x32xf32>
    tpu.vector_store %arg4[%c0_6, %c0_7], %7 {strides = array<i32>} : memref<72x32xf32, #tpu.memory_space<vmem>>, vector<72x32xf32>,
    return
  }
  func.func @transform_0(%arg0: i32) -> (i32, i32) {
    %c0_i32 = arith.constant 0 : i32
    %c0_i32_0 = arith.constant 0 : i32
    return %arg0, %c0_i32 : i32, i32
  }
  func.func @transform_1(%arg0: i32) -> (i32, i32) {
    %c0_i32 = arith.constant 0 : i32
    %c0_i32_0 = arith.constant 0 : i32
    %c0_i32_1 = arith.constant 0 : i32
    return %c0_i32, %c0_i32_0 : i32, i32
  }
  func.func @transform_2(%arg0: i32) -> (i32, i32) {
    %c0_i32 = arith.constant 0 : i32
    %c0_i32_0 = arith.constant 0 : i32
    %c0_i32_1 = arith.constant 0 : i32
    return %c0_i32, %c0_i32_0 : i32, i32
  }
  func.func @transform_3(%arg0: i32) -> (i32, i32) {
    %c0_i32 = arith.constant 0 : i32
    %c0_i32_0 = arith.constant 0 : i32
    return %arg0, %c0_i32 : i32, i32
  }
}

</mosaic_0001>

<llo_original>
// kernel: tpu_custom_call.1
$region0: #{tpu_custom_call.1}
  #allocation0 [shape = 'u32[]', space=smem, size = 0x4, offset = 0x4, fixed_abs, tag = 'smem constant byte address 0x4 - core index']
  #allocation1 [shape = 'u32[144,128]{1,0:T(1,128)}', space=vmem, size = 0x12000, scoped, tag = 'internal scratch']
  %s0 = inlined_call_operand.vmem [shape: f32[144,16], index: 0, kind: input, shape index: {}]
  %s1 = inlined_call_operand.vmem [shape: f32[16,32], index: 1, kind: input, shape index: {}]
  %s2 = inlined_call_operand.vmem [shape: f32[1,32], index: 2, kind: input, shape index: {}]
  %s3 = inlined_call_operand.vmem [shape: f32[144,32], index: 3, kind: output, shape index: {}]
  %s4 = sld [smem:[#allocation0]]
  $region45: #{tpu_custom_call.1} parent=0
    _
  %s6 = ssub.s32 1, %s4
  %s7 = scalar_select 0, %s6, %s4
  loop: start=0, step=1, limit=4
  $region2: #{tpu_custom_call.1} parent=0 // loop_pre_header
    _
  $region3: #{tpu_custom_call.1} parent=0 // loop_header
    %s9 = sphi 0, %s13
    %p10 = scmp.ge.s32.totalorder %s9, 4
    %s19 = sphi 0, %s21
    %s22 = sphi 0, %s19
    %s23 = sphi 0, %s22
    %s39 = sphi 0, %s23
    %s43 = sphi 0, %s43
    %s45 = sphi 0, %s43
    %s46 = sphi 0, %s45
    %s60 = sphi 0, %s46
    %s64 = sphi 0, %s64
    %s66 = sphi 0, %s64
    %s67 = sphi 0, %s66
    %s81 = sphi 0, %s67
    %s87 = sphi 0, %s89
    %s90 = sphi 0, %s87
    %s91 = sphi 0, %s90
    %s107 = sphi 0, %s91
  $region4: #{tpu_custom_call.1} parent=0 // loop_header_branch
    %12 = sbr.rel (%p10) target = $region8
  $region5: #{tpu_custom_call.1} parent=0 // loop_body
    %s14 = ssub.s32 %s9, 1
    %s15 = ssub.s32 %s9, 2
    %s16 = sadd.s32 %s9, 1
    %s17 = ssub.s32 %s9, %s16
    %p18 = scmp.eq.s32.totalorder %s17, 0
    %s20 = sadd.s32 %s19, 1
    %s21 = scalar_select %p18, %s19, %s20
    %p24 = pneg %p18
    %p25 = scmp.eq.s32.totalorder %s9, 1
    %p26 = por %p24, %p25
    %p27 = scmp.ne.s32.totalorder %s19, %s22
    %p28 = scmp.eq.s32.totalorder %s9, 0
    %p29 = por %p27, %p28
    %p30 = scmp.ne.s32.totalorder %s19, %s22
    %p31 = scmp.eq.s32.totalorder %s14, 1
    %p32 = por %p30, %p31
    %p33 = scmp.ne.s32.totalorder %s22, %s23
    %p34 = scmp.eq.s32.totalorder %s14, 0
    %p35 = por %p33, %p34
    %p36 = scmp.ne.s32.totalorder %s22, %s23
    %p37 = scmp.eq.s32.totalorder %s15, 1
    %p38 = por %p36, %p37
    %p40 = scmp.ne.s32.totalorder %s23, %s39
    %p41 = scmp.eq.s32.totalorder %s15, 0
    %p42 = por %p40, %p41
    %s44 = sadd.s32 %s43, 1
    %p47 = scmp.eq.s32.totalorder %s9, 1
    %p48 = scmp.ne.s32.totalorder %s43, %s45
    %p49 = scmp.eq.s32.totalorder %s9, 0
    %p50 = por %p48, %p49
    %p51 = scmp.ne.s32.totalorder %s43, %s45
    %p52 = scmp.eq.s32.totalorder %s14, 1
    %p53 = por %p51, %p52
    %p54 = scmp.ne.s32.totalorder %s45, %s46
    %p55 = scmp.eq.s32.totalorder %s14, 0
    %p56 = por %p54, %p55
    %p57 = scmp.ne.s32.totalorder %s45, %s46
    %p58 = scmp.eq.s32.totalorder %s15, 1
    %p59 = por %p57, %p58
    %p61 = scmp.ne.s32.totalorder %s46, %s60
    %p62 = scmp.eq.s32.totalorder %s15, 0
    %p63 = por %p61, %p62
    %s65 = sadd.s32 %s64, 1
    %p68 = scmp.eq.s32.totalorder %s9, 1
    %p69 = scmp.ne.s32.totalorder %s64, %s66
    %p70 = scmp.eq.s32.totalorder %s9, 0
    %p71 = por %p69, %p70
    %p72 = scmp.ne.s32.totalorder %s64, %s66
    %p73 = scmp.eq.s32.totalorder %s14, 1
    %p74 = por %p72, %p73
    %p75 = scmp.ne.s32.totalorder %s66, %s67
    %p76 = scmp.eq.s32.totalorder %s14, 0
    %p77 = por %p75, %p76
    %p78 = scmp.ne.s32.totalorder %s66, %s67
    %p79 = scmp.eq.s32.totalorder %s15, 1
    %p80 = por %p78, %p79
    %p82 = scmp.ne.s32.totalorder %s67, %s81
    %p83 = scmp.eq.s32.totalorder %s15, 0
    %p84 = por %p82, %p83
    %s85 = ssub.s32 %s9, %s16
    %p86 = scmp.eq.s32.totalorder %s85, 0
    %s88 = sadd.s32 %s87, 1
    %s89 = scalar_select %p86, %s87, %s88
    %p92 = pneg %p86
    %p93 = scmp.eq.s32.totalorder %s9, 1
    %p94 = por %p92, %p93
    %p95 = scmp.ne.s32.totalorder %s87, %s90
    %p96 = scmp.eq.s32.totalorder %s9, 0
    %p97 = por %p95, %p96
    %p98 = scmp.ne.s32.totalorder %s87, %s90
    %p99 = scmp.eq.s32.totalorder %s14, 1
    %p100 = por %p98, %p99
    %p101 = scmp.ne.s32.totalorder %s90, %s91
    %p102 = scmp.eq.s32.totalorder %s14, 0
    %p103 = por %p101, %p102
    %p104 = scmp.ne.s32.totalorder %s90, %s91
    %p105 = scmp.eq.s32.totalorder %s15, 1
    %p106 = por %p104, %p105
    %p108 = scmp.ne.s32.totalorder %s91, %s107
    %p109 = scmp.eq.s32.totalorder %s15, 0
    %p110 = por %p108, %p109
    %p111 = scmp.le.s32.totalorder 1, %s9
    %p112 = scmp.lt.s32.totalorder %s9, 3
    %p113 = pnand %p111, %p112
    %p114 = pneg %p113
    // Predicated region
    $region9: #{tpu_custom_call.1} parent=5 // pred_check
      _
    $region10: #{tpu_custom_call.1} parent=5 // pred_check_branch
      %116 = sbr.rel (%p113) target = $region12
    $region11: #{tpu_custom_call.1} parent=5 // pred_region
      %s117 = ssub.s32 %s9, 1
      // Predicated region
      $region13: #{tpu_custom_call.1} parent=11 // pred_check
        %p118 = pneg %p56
      $region14: #{tpu_custom_call.1} parent=11 // pred_check_branch
        %120 = sbr.rel (%p118) target = $region16
      $region15: #{tpu_custom_call.1} parent=11 // pred_region
        _
      $region16: #{tpu_custom_call.1} parent=11 // pred_fallthru
        _
      // Predicated region
      $region17: #{tpu_custom_call.1} parent=11 // pred_check
        %p121 = pneg %p77
      $region18: #{tpu_custom_call.1} parent=11 // pred_check_branch
        %123 = sbr.rel (%p121) target = $region20
      $region19: #{tpu_custom_call.1} parent=11 // pred_region
        _
      $region20: #{tpu_custom_call.1} parent=11 // pred_fallthru
        _
    $region12: #{tpu_custom_call.1} parent=5 // pred_fallthru
      _
    %p124 = scmp.lt.s32.totalorder %s9, 2
    // Predicated region
    $region21: #{tpu_custom_call.1} parent=5 // pred_check
      %p125 = pneg %p124
    $region22: #{tpu_custom_call.1} parent=5 // pred_check_branch
      %127 = sbr.rel (%p125) target = $region24
    $region23: #{tpu_custom_call.1} parent=5 // pred_region
      // Predicated region
      $region25: #{tpu_custom_call.1} parent=23 // pred_check
        %p128 = pneg %p29
      $region26: #{tpu_custom_call.1} parent=23 // pred_check_branch
        %130 = sbr.rel (%p128) target = $region28
      $region27: #{tpu_custom_call.1} parent=23 // pred_region
        %s131 = smul.u32 9, %s9
        %p132 = scmp.lt.s32.totalorder %s131, 17
        %s133 = scalar_select %p132, %s131, 17
        %s134 = smul.addr %s133, 8
        %s135 = scalar_lea.vmem %s0, %s134
        %s136 = smul.u32 9, %s9
      $region28: #{tpu_custom_call.1} parent=23 // pred_fallthru
        _
    $region24: #{tpu_custom_call.1} parent=5 // pred_fallthru
      _
    %p137 = scmp.le.s32.totalorder 1, %s9
    %p138 = scmp.lt.s32.totalorder %s9, 3
    %p139 = pnand %p137, %p138
    %p140 = pneg %p139
    // Predicated region
    $region29: #{tpu_custom_call.1} parent=5 // pred_check
      _
    $region30: #{tpu_custom_call.1} parent=5 // pred_check_branch
      %142 = sbr.rel (%p139) target = $region32
    $region31: #{tpu_custom_call.1} parent=5 // pred_region
      %s143 = ssub.s32 %s9, 1
      %s144 = smul.u32 9, %s14
      %p145 = scmp.lt.s32.totalorder %s144, 17
      %s146 = scalar_select %p145, %s144, 17
      %s147 = smul.addr %s146, 8
      %s148 = scalar_lea.vmem %s0, %s147
      %p149 = pneg %p35
      %p150 = pneg %p32
      %p151 = pneg %p56
      %p152 = pneg %p53
      %p153 = pneg %p77
      %p154 = pneg %p74
      %p155 = pneg %p103
      %p156 = pneg %p100
      %s157 = smul.u32 9, %s14
      %p158 = scmp.lt.s32.totalorder %s157, 17
      %s159 = scalar_select %p158, %s157, 17
      %s160 = smul.addr %s159, 8
      %s161 = scalar_lea.vmem %s3, %s160
      %s162 = smul.u32 9, %s14
      %p163 = scmp.lt.s32.totalorder %s162, 17
      %s164 = scalar_select %p163, %s162, 17
      %s165 = smul.addr %s164, 8
      %s166 = scalar_lea.vmem %s0, %s165
      %s167 = smul.u32 9, %s14
      %s168 = smul.u32 9, %s14
      %p169 = scmp.lt.s32.totalorder %s168, 17
      %s170 = scalar_select %p169, %s168, 17
      %s171 = smul.addr %s170, 8
      %s172 = scalar_lea.vmem %s3, %s171
      %s173 = smul.u32 9, %s14
      %v174 = vld [vmem:[%s166] sm:$0xff]
      %v175 = vld [vmem:[%s166 + $0x8] sm:$0xff]
      %v176 = vld [vmem:[%s166 + $0x10] sm:$0xff]
      %v177 = vld [vmem:[%s166 + $0x18] sm:$0xff]
      %v178 = vld [vmem:[%s166 + $0x20] sm:$0xff]
      %v179 = vld [vmem:[%s166 + $0x28] sm:$0xff]
      %v180 = vld [vmem:[%s166 + $0x30] sm:$0xff]
      %v181 = vld [vmem:[%s166 + $0x38] sm:$0xff]
      %v182 = vld [vmem:[%s166 + $0x40] sm:$0xff]
      %v183 = vld [vmem:[%s1] sm:$0xff]
      %v184 = vld [vmem:[%s1 + $0x8] sm:$0xff]
      %v185 = vld [vmem:[%s2] sm:$0x1]
      %v187 = vlaneseq
      %v188 = vshrl.u32 %v187, 7
      %v189 = vsub.s32 0, %v188
      %v190 = vrot.slane %v185, %v189
      %vm192 = vcmask 130048
      %v194 = vsel %vm192, %v174, 0
      %v197 = vsel %vm192, %v175, 0
      %v200 = vsel %vm192, %v176, 0
      %v203 = vsel %vm192, %v177, 0
      %v206 = vsel %vm192, %v178, 0
      %v209 = vsel %vm192, %v179, 0
      %v212 = vsel %vm192, %v180, 0
      %v215 = vsel %vm192, %v181, 0
      %v218 = vsel %vm192, %v182, 0
      %220 = vmatprep.subr.mxu0 0.0
      %221 = vmatpush1.msra.mxu0 0.0
      %222 = vmatprep.subr.mxu0 0.0
      %223 = vmatpush1.msra.mxu0 0.0
      %224 = vmatprep.subr.mxu0 0.0
      %225 = vmatpush1.msra.mxu0 0.0
      %226 = vmatprep.subr.mxu0 0.0
      %227 = vmatpush1.msra.mxu0 0.0
      %228 = vmatprep.subr.mxu0 0.0
      %229 = vmatpush1.msra.mxu0 0.0
      %230 = vmatprep.subr.mxu0 0.0
      %231 = vmatpush1.msra.mxu0 0.0
      %232 = vmatprep.subr.mxu0 0.0
      %233 = vmatpush1.msra.mxu0 0.0
      %234 = vmatprep.subr.mxu0 0.0
      %235 = vmatpush1.msra.mxu0 0.0
      %236 = vmatprep.subr.mxu0 0.0
      %237 = vmatpush1.msra.mxu0 0.0
      %238 = vmatprep.subr.mxu0 0.0
      %239 = vmatpush1.msra.mxu0 0.0
      %240 = vmatprep.subr.mxu0 0.0
      %241 = vmatpush1.msra.mxu0 0.0
      %242 = vmatprep.subr.mxu0 0.0
      %243 = vmatpush1.msra.mxu0 0.0
      %244 = vmatprep.subr.mxu0 0.0
      %245 = vmatpush1.msra.mxu0 0.0
      %246 = vmatprep.subr.mxu0 0.0
      %247 = vmatpush1.msra.mxu0 0.0
      %248 = vmatprep.subr.mxu0 0.0
      %249 = vmatpush1.msra.mxu0 %v184
      %250 = vmatprep.subr.mxu0 0.0
      %251 = vmatpush1.msra.mxu0 %v183
      %252 = vmatprep.subr.mxu0 0.0
      %253 = vmatpush2.msra.mxu0 0.0
      %254 = vmatprep.subr.mxu0 0.0
      %255 = vmatpush2.msra.mxu0 0.0
      %256 = vmatprep.subr.mxu0 0.0
      %257 = vmatpush2.msra.mxu0 0.0
      %258 = vmatprep.subr.mxu0 0.0
      %259 = vmatpush2.msra.mxu0 0.0
      %260 = vmatprep.subr.mxu0 0.0
      %261 = vmatpush2.msra.mxu0 0.0
      %262 = vmatprep.subr.mxu0 0.0
      %263 = vmatpush2.msra.mxu0 0.0
      %264 = vmatprep.subr.mxu0 0.0
      %265 = vmatpush2.msra.mxu0 0.0
      %266 = vmatprep.subr.mxu0 0.0
      %267 = vmatpush2.msra.mxu0 0.0
      %268 = vmatprep.subr.mxu0 0.0
      %269 = vmatpush2.msra.mxu0 0.0
      %270 = vmatprep.subr.mxu0 0.0
      %271 = vmatpush2.msra.mxu0 0.0
      %272 = vmatprep.subr.mxu0 0.0
      %273 = vmatpush2.msra.mxu0 0.0
      %274 = vmatprep.subr.mxu0 0.0
      %275 = vmatpush2.msra.mxu0 0.0
      %276 = vmatprep.subr.mxu0 0.0
      %277 = vmatpush2.msra.mxu0 0.0
      %278 = vmatprep.subr.mxu0 0.0
      %279 = vmatpush2.msra.mxu0 0.0
      %280 = vmatprep.subr.mxu0 0.0
      %281 = vmatpush2.msra.mxu0 0.0
      %282 = vmatprep.subr.mxu0 0.0
      %283 = vmatpush2.msra.mxu0 0.0
      %284 = vmatprep.mubr.f32.mxu0 0.0
      %285 = vmatmul.mubr.f32.gmra.mxu0 %v194
      %v286 = vpop.f32.mrf.mxu0
      %v287 = vadd.f32 %v190, %v286
      %v288 = vpop.f32.mrf.mxu0
      %289 = vmatprep.mubr.f32.mxu0 0.0
      %290 = vmatmul.mubr.f32.gmra.mxu0 %v197
      %v291 = vpop.f32.mrf.mxu0
      %v292 = vadd.f32 %v190, %v291
      %v293 = vpop.f32.mrf.mxu0
      %294 = vmatprep.mubr.f32.mxu0 0.0
      %295 = vmatmul.mubr.f32.gmra.mxu0 %v200
      %v296 = vpop.f32.mrf.mxu0
      %v297 = vadd.f32 %v190, %v296
      %v298 = vpop.f32.mrf.mxu0
      %299 = vmatprep.mubr.f32.mxu0 0.0
      %300 = vmatmul.mubr.f32.gmra.mxu0 %v203
      %v301 = vpop.f32.mrf.mxu0
      %v302 = vadd.f32 %v190, %v301
      %v303 = vpop.f32.mrf.mxu0
      %304 = vmatprep.mubr.f32.mxu0 0.0
      %305 = vmatmul.mubr.f32.gmra.mxu0 %v206
      %v306 = vpop.f32.mrf.mxu0
      %v307 = vadd.f32 %v190, %v306
      %v308 = vpop.f32.mrf.mxu0
      %309 = vmatprep.mubr.f32.mxu0 0.0
      %310 = vmatmul.mubr.f32.gmra.mxu0 %v209
      %v311 = vpop.f32.mrf.mxu0
      %v312 = vadd.f32 %v190, %v311
      %v313 = vpop.f32.mrf.mxu0
      %314 = vmatprep.mubr.f32.mxu0 0.0
      %315 = vmatmul.mubr.f32.gmra.mxu0 %v212
      %v316 = vpop.f32.mrf.mxu0
      %v317 = vadd.f32 %v190, %v316
      %v318 = vpop.f32.mrf.mxu0
      %319 = vmatprep.mubr.f32.mxu0 0.0
      %320 = vmatmul.mubr.f32.gmra.mxu0 %v215
      %v321 = vpop.f32.mrf.mxu0
      %v322 = vadd.f32 %v190, %v321
      %v323 = vpop.f32.mrf.mxu0
      %324 = vmatprep.mubr.f32.mxu0 0.0
      %325 = vmatmul.mubr.f32.gmra.mxu0 %v218
      %v326 = vpop.f32.mrf.mxu0
      %v327 = vadd.f32 %v190, %v326
      %v328 = vpop.f32.mrf.mxu0
      %329 = vdwg.mxu0
      %v330 = vmax.f32 %v287, 0.0
      %v331 = vmax.f32 %v292, 0.0
      %v332 = vmax.f32 %v297, 0.0
      %v333 = vmax.f32 %v302, 0.0
      %v334 = vmax.f32 %v307, 0.0
      %v335 = vmax.f32 %v312, 0.0
      %v336 = vmax.f32 %v317, 0.0
      %v337 = vmax.f32 %v322, 0.0
      %v338 = vmax.f32 %v327, 0.0
      %vm339 = vcmask 261120
      %340 = vst.msk [vmem:[%s172] sm:$0xff] %vm339, %v330
      %341 = vst.msk [vmem:[%s172 + $0x8] sm:$0xff] %vm339, %v331
      %342 = vst.msk [vmem:[%s172 + $0x10] sm:$0xff] %vm339, %v332
      %343 = vst.msk [vmem:[%s172 + $0x18] sm:$0xff] %vm339, %v333
      %344 = vst.msk [vmem:[%s172 + $0x20] sm:$0xff] %vm339, %v334
      %345 = vst.msk [vmem:[%s172 + $0x28] sm:$0xff] %vm339, %v335
      %346 = vst.msk [vmem:[%s172 + $0x30] sm:$0xff] %vm339, %v336
      %347 = vst.msk [vmem:[%s172 + $0x38] sm:$0xff] %vm339, %v337
      %348 = vst.msk [vmem:[%s172 + $0x40] sm:$0xff] %vm339, %v338
      %s349 = smul.u32 9, %s14
      %p350 = scmp.lt.s32.totalorder %s349, 17
      %s351 = scalar_select %p350, %s349, 17
      %s352 = smul.addr %s351, 8
      %s353 = scalar_lea.vmem %s3, %s352
      // Predicated region
      $region33: #{tpu_custom_call.1} parent=31 // pred_check
        %p354 = pneg %p100
      $region34: #{tpu_custom_call.1} parent=31 // pred_check_branch
        %356 = sbr.rel (%p354) target = $region36
      $region35: #{tpu_custom_call.1} parent=31 // pred_region
        %s357 = smul.u32 9, %s14
      $region36: #{tpu_custom_call.1} parent=31 // pred_fallthru
        _
    $region32: #{tpu_custom_call.1} parent=5 // pred_fallthru
      _
    %p358 = scmp.le.s32.totalorder 2, %s9
    // Predicated region
    $region37: #{tpu_custom_call.1} parent=5 // pred_check
      %p359 = pneg %p358
    $region38: #{tpu_custom_call.1} parent=5 // pred_check_branch
      %361 = sbr.rel (%p359) target = $region40
    $region39: #{tpu_custom_call.1} parent=5 // pred_region
      %s362 = ssub.s32 %s9, 2
      // Predicated region
      $region41: #{tpu_custom_call.1} parent=39 // pred_check
        %p363 = pneg %p106
      $region42: #{tpu_custom_call.1} parent=39 // pred_check_branch
        %365 = sbr.rel (%p363) target = $region44
      $region43: #{tpu_custom_call.1} parent=39 // pred_region
        %s366 = smul.u32 9, %s15
        %p367 = scmp.lt.s32.totalorder %s366, 17
        %s368 = scalar_select %p367, %s366, 17
        %s369 = smul.addr %s368, 8
        %s370 = scalar_lea.vmem %s3, %s369
      $region44: #{tpu_custom_call.1} parent=39 // pred_fallthru
        _
    $region40: #{tpu_custom_call.1} parent=5 // pred_fallthru
      _
  $region6: #{tpu_custom_call.1} parent=0 // loop_footer
    %s13 = sadd.s32 1, %s9
  $region7: #{tpu_custom_call.1} parent=0 // loop_footer_branch
    %8 = sbr.rel target = $region3
  $region8: #{tpu_custom_call.1} parent=0 // loop_exit
    _

</llo_original>
